<compile_context>
chip_gen: v6e
topology: v6e:2x2x1
jax: 0.10.0
libtpu: 0.0.40
codegen_flags: <defaults>
</compile_context>

<pallas_src>
import jax
import jax.numpy as jnp
from jax import lax
from jax.experimental import pallas as pl
from jax.experimental.pallas import tpu as pltpu

EPS = 1e-12
# NOTE: omega = 1e-12 is copied verbatim from the PyTorch module (self.omega = 1e-12).
# Canonical iNALU uses omega ~ 20; with 1e-12 the multiplicative path saturates near 1.
# We keep the module's value to preserve forward-pass semantics exactly.
OMEGA = 1e-12

_LANE = 128
_SUBLANE = 8


def _round_up(x, m):
    return (x + m - 1) // m * m


# ---------------------------------------------------------------------------
# Kernel
# ---------------------------------------------------------------------------
def _inalu_kernel(x_ref, wa_ref, g_ref, wm_ref, y_ref):
    x = x_ref[...]                                             # (tb, in_dim)

    # Additive NAC path:  a = x @ w_a.T
    a = lax.dot_general(
        x, wa_ref[...],
        dimension_numbers=(((1,), (1,)), ((), ())),
        preferred_element_type=jnp.float32)

    # Gate: g = sigmoid(x @ G.T)
    g = jax.nn.sigmoid(lax.dot_general(
        x, g_ref[...],
        dimension_numbers=(((1,), (1,)), ((), ())),
        preferred_element_type=jnp.float32))

    # Multiplicative NAC path: m = exp(min(log(max(|x|, eps)) @ w_m.T, omega))
    log_x = jnp.log(jnp.maximum(jnp.abs(x), EPS))
    m = lax.dot_general(
        log_x, wm_ref[...],
        dimension_numbers=(((1,), (1,)), ((), ())),
        preferred_element_type=jnp.float32)
    m = jnp.exp(jnp.minimum(m, OMEGA))

    # Blend: g*a + (1-g)*m  ==  m + g*(a-m)   (one fewer VALU op per element)
    y_ref[...] = m + g * (a - m)


# ---------------------------------------------------------------------------
# Tiling / VMEM budgeting
# ---------------------------------------------------------------------------
def _vmem_capacity_bytes():
    try:
        info = pltpu.get_tpu_info()
        for name in ("vmem_capacity_bytes", "vmem_size_bytes", "vmem_bytes"):
            cap = getattr(info, name, None)
            if cap:
                return int(cap)
    except Exception:
        pass
    return 64 * 1024 * 1024          # conservative fallback: v7x per-TC VMEM


def _vmem_budget_and_limit():
    cap = _vmem_capacity_bytes()
    if cap >= 96 * 1024 * 1024:      # v5e / v6e: 128 MiB physical VMEM
        return 80 * 1024 * 1024, 100 * 1024 * 1024
    return 40 * 1024 * 1024, 56 * 1024 * 1024   # v7x: 64 MiB physical VMEM


def _weight_vmem_bytes(tn, in_dim):
    # 3 weight matrices (w_a, G, w_m), conservatively assume double-buffering.
    return 2 * 3 * tn * in_dim * 4


def _pick_tn(in_dim, out_dim, budget):
    """Output-dim tile: full out_dim when the weights fit comfortably in VMEM,
    otherwise a multiple of 128 streamed over a second grid axis."""
    if _weight_vmem_bytes(out_dim, in_dim) <= budget // 2:
        return out_dim
    tn = _LANE
    while tn + _LANE < out_dim and _weight_vmem_bytes(tn + _LANE, in_dim) <= budget // 2:
        tn += _LANE
    return tn


def _pick_tb(batch, in_dim, tn, budget):
    """Largest batch tile whose footprint fits the budget, capped at ceil(B/2)
    (rounded to sublanes) so v7x's two TensorCores both get grid steps."""
    megacore_cap = max(_SUBLANE, _round_up(pl.cdiv(batch, 2), _SUBLANE))
    w_bytes = _weight_vmem_bytes(tn, in_dim)
    for tb in (8192, 4096, 2048, 1024, 512, 256, 128, 64, 32, 16, 8):
        io_bytes = 2 * tb * (in_dim + tn) * 4       # double-buffered x / y tiles
        tmp_bytes = tb * (in_dim + 4 * tn) * 4      # log_x, a, g, m temporaries
        if w_bytes + io_bytes + tmp_bytes <= budget:
            return min(tb, megacore_cap)
    return _SUBLANE


# ---------------------------------------------------------------------------
# Wrapper
# ---------------------------------------------------------------------------
def inalu_forward(x, G, Wa_hat, Ma_hat, Wm_hat, Mm_hat, *, tb=None, tn=None):
    """x: (B, in_dim) f32.  G, *_hat: (out_dim, in_dim) (PyTorch convention)."""
    B, in_dim = x.shape
    out_dim = G.shape[0]

    budget, vmem_limit = _vmem_budget_and_limit()

    # Effective NAC weights: one fused elementwise pass, hoisted out of the kernel.
    w_a = jnp.tanh(Wa_hat) * jax.nn.sigmoid(Ma_hat)            # (out, in)
    w_m = jnp.tanh(Wm_hat) * jax.nn.sigmoid(Mm_hat)            # (out, in)

    # Tile selection (out_dim tile must be a multiple of 128 or the full out_dim).
    if tn is None:
        tn = _pick_tn(in_dim, out_dim, budget)
    if tn >= out_dim:
        tn = out_dim
    else:
        tn = max(_LANE, _round_up(tn, _LANE))
    if tb is None:
        tb = _pick_tb(B, in_dim, tn, budget)
    tb = max(_SUBLANE, _round_up(tb, _SUBLANE))

    # Ragged last blocks are masked by Pallas: no wrapper-side pad of x and no
    # output padding/slice -> no extra HBM copies.
    grid = (pl.cdiv(B, tb), pl.cdiv(out_dim, tn))

    y = pl.pallas_call(
        _inalu_kernel,
        out_shape=jax.ShapeDtypeStruct((B, out_dim), jnp.float32),
        grid=grid,
        in_specs=[
            pl.BlockSpec((tb, in_dim), lambda i, j: (i, 0)),    # x batch tile
            pl.BlockSpec((tn, in_dim), lambda i, j: (j, 0)),    # w_a (VMEM-resident)
            pl.BlockSpec((tn, in_dim), lambda i, j: (j, 0)),    # G   (VMEM-resident)
            pl.BlockSpec((tn, in_dim), lambda i, j: (j, 0)),    # w_m (VMEM-resident)
        ],
        out_specs=pl.BlockSpec((tb, tn), lambda i, j: (i, j)),  # direct, unpadded output
        compiler_params=pltpu.CompilerParams(
            dimension_semantics=("parallel", "parallel"),
            vmem_limit_bytes=vmem_limit,
        ),
    )(x, w_a, G, w_m)

    return y


# ---------------------------------------------------------------------------
# Pure-JAX reference & test harness
# ---------------------------------------------------------------------------
def inalu_reference(x, G, Wa_hat, Ma_hat, Wm_hat, Mm_hat):
    """Pure-JAX reference mirroring the PyTorch forward exactly."""
    w_a = jnp.tanh(Wa_hat) * jax.nn.sigmoid(Ma_hat)
    w_m = jnp.tanh(Wm_hat) * jax.nn.sigmoid(Mm_hat)
    a = x @ w_a.T
    m = jnp.log(jnp.maximum(jnp.abs(x), EPS)) @ w_m.T
    m = jnp.exp(jnp.minimum(m, OMEGA))
    g = jax.nn.sigmoid(x @ G.T)
    return g * a + (1.0 - g) * m


def xavier_normal(key, out_dim, in_dim):
    std = (2.0 / (in_dim + out_dim)) ** 0.5
    return std * jax.random.normal(key, (out_dim, in_dim), dtype=jnp.float32)


if __name__ == "__main__":
    key = jax.random.PRNGKey(0)
    (kx, kg, k1, k2, k3, k4,
     kx2, kg2, k5, k6, k7, k8, kx3) = jax.random.split(key, 13)

    # --- Test 1: small square dims (batch=8, in=32, out=32) -------------------
    batch, in_dim, out_dim = 8, 32, 32
    x = jax.random.normal(kx, (batch, in_dim), dtype=jnp.float32)
    G = xavier_normal(kg, out_dim, in_dim)
    Wa_hat = xavier_normal(k1, out_dim, in_dim)
    Ma_hat = xavier_normal(k2, out_dim, in_dim)
    Wm_hat = xavier_normal(k3, out_dim, in_dim)
    Mm_hat = xavier_normal(k4, out_dim, in_dim)

    y = jax.block_until_ready(inalu_forward(x, G, Wa_hat, Ma_hat, Wm_hat, Mm_hat))
    y_ref = inalu_reference(x, G, Wa_hat, Ma_hat, Wm_hat, Mm_hat)
    assert y.shape == (batch, out_dim)
    assert jnp.allclose(y, y_ref, atol=1e-5, rtol=1e-5), "mismatch vs reference"

    # --- Test 2: ragged batch grid (B=20, tb=8 -> 3 steps, last block masked) --
    x2 = jax.random.normal(kx2, (20, in_dim), dtype=jnp.float32)
    y2 = jax.block_until_ready(
        inalu_forward(x2, G, Wa_hat, Ma_hat, Wm_hat, Mm_hat, tb=8))
    y2_ref = inalu_reference(x2, G, Wa_hat, Ma_hat, Wm_hat, Mm_hat)
    assert y2.shape == (20, out_dim)
    assert jnp.allclose(y2, y2_ref, atol=1e-5, rtol=1e-5), "mismatch (ragged batch)"

    # --- Test 3: out_dim tiling path (out=160, tn=128 -> 2 N tiles, last ragged)
    in3, out3 = 32, 160
    x3 = jax.random.normal(kx3, (16, in3), dtype=jnp.float32)
    G3 = xavier_normal(kg2, out3, in3)
    Wa3 = xavier_normal(k5, out3, in3)
    Ma3 = xavier_normal(k6, out3, in3)
    Wm3 = xavier_normal(k7, out3, in3)
    Mm3 = xavier_normal(k8, out3, in3)
    y3 = jax.block_until_ready(
        inalu_forward(x3, G3, Wa3, Ma3, Wm3, Mm3, tn=128))
    y3_ref = inalu_reference(x3, G3, Wa3, Ma3, Wm3, Mm3)
    assert y3.shape == (16, out3)
    assert jnp.allclose(y3, y3_ref, atol=1e-5, rtol=1e-5), "mismatch (N-tiled)"

    print("KERNEL_OK")
</pallas_src>

<mosaic_0001>
module attributes {stable_mosaic.version = 11 : i64} {
  func.func @_inalu_kernel(%arg0: i32, %arg1: i32, %arg2: memref<8x32xf32, #tpu.memory_space<vmem>>, %arg3: memref<32x32xf32, #tpu.memory_space<vmem>>, %arg4: memref<32x32xf32, #tpu.memory_space<vmem>>, %arg5: memref<32x32xf32, #tpu.memory_space<vmem>>, %arg6: memref<8x32xf32, #tpu.memory_space<vmem>>) attributes {dimension_semantics = [#tpu.dimension_semantics<parallel>, #tpu.dimension_semantics<parallel>], iteration_bounds = array<i64: 1, 1>, scalar_prefetch = 0 : i64, scratch_operands = 0 : i64, tpu.core_type = #tpu.core_type<tc>, window_params = [{transform_indices = @transform_0, window_bounds = array<i64: 8, 32>}, {transform_indices = @transform_1, window_bounds = array<i64: 32, 32>}, {transform_indices = @transform_2, window_bounds = array<i64: 32, 32>}, {transform_indices = @transform_3, window_bounds = array<i64: 32, 32>}, {transform_indices = @transform_4, window_bounds = array<i64: 8, 32>}]} {
    %c0 = arith.constant 0 : index
    %c0_0 = arith.constant 0 : index
    %0 = vector.load %arg2[%c0, %c0_0] : memref<8x32xf32, #tpu.memory_space<vmem>>, vector<8x32xf32>
    %c0_1 = arith.constant 0 : index
    %c0_2 = arith.constant 0 : index
    %1 = vector.load %arg3[%c0_1, %c0_2] : memref<32x32xf32, #tpu.memory_space<vmem>>, vector<32x32xf32>
    %cst = arith.constant dense<0.000000e+00> : vector<8x32xf32>
    %2 = tpu.matmul %0, %1, %cst {dimension_numbers = #tpu.dot_dimension_numbers<[1], [1], [0], [0], [0, 0, 1, 0], [], []>} : vector<8x32xf32>, vector<32x32xf32>, vector<8x32xf32> -> vector<8x32xf32>
    %c0_3 = arith.constant 0 : index
    %c0_4 = arith.constant 0 : index
    %3 = vector.load %arg4[%c0_3, %c0_4] : memref<32x32xf32, #tpu.memory_space<vmem>>, vector<32x32xf32>
    %cst_5 = arith.constant dense<0.000000e+00> : vector<8x32xf32>
    %4 = tpu.matmul %0, %3, %cst_5 {dimension_numbers = #tpu.dot_dimension_numbers<[1], [1], [0], [0], [0, 0, 1, 0], [], []>} : vector<8x32xf32>, vector<32x32xf32>, vector<8x32xf32> -> vector<8x32xf32>
    %5 = arith.negf %4 : vector<8x32xf32>
    %6 = math.exp %5 : vector<8x32xf32>
    %cst_6 = arith.constant 1.000000e+00 : f32
    %7 = vector.broadcast %cst_6 : f32 to vector<8x32xf32>
    %8 = arith.addf %7, %6 : vector<8x32xf32>
    %9 = arith.divf %7, %8 : vector<8x32xf32>
    %10 = math.absf %0 : vector<8x32xf32>
    %cst_7 = arith.constant 9.99999996E-13 : f32
    %11 = vector.broadcast %cst_7 : f32 to vector<8x32xf32>
    %12 = arith.maximumf %10, %11 : vector<8x32xf32>
    %13 = math.log %12 : vector<8x32xf32>
    %c0_8 = arith.constant 0 : index
    %c0_9 = arith.constant 0 : index
    %14 = vector.load %arg5[%c0_8, %c0_9] : memref<32x32xf32, #tpu.memory_space<vmem>>, vector<32x32xf32>
    %cst_10 = arith.constant dense<0.000000e+00> : vector<8x32xf32>
    %15 = tpu.matmul %13, %14, %cst_10 {dimension_numbers = #tpu.dot_dimension_numbers<[1], [1], [0], [0], [0, 0, 1, 0], [], []>} : vector<8x32xf32>, vector<32x32xf32>, vector<8x32xf32> -> vector<8x32xf32>
    %cst_11 = arith.constant 9.99999996E-13 : f32
    %16 = vector.broadcast %cst_11 : f32 to vector<8x32xf32>
    %17 = arith.minimumf %15, %16 : vector<8x32xf32>
    %18 = math.exp %17 : vector<8x32xf32>
    %19 = arith.subf %2, %18 : vector<8x32xf32>
    %20 = arith.mulf %9, %19 : vector<8x32xf32>
    %21 = arith.addf %18, %20 : vector<8x32xf32>
    %c0_12 = arith.constant 0 : index
    %c0_13 = arith.constant 0 : index
    %22 = vector.load %arg6[%c0_12, %c0_13] : memref<8x32xf32, #tpu.memory_space<vmem>>, vector<8x32xf32>
    tpu.vector_store %arg6[%c0_12, %c0_13], %21 {strides = array<i32>} : memref<8x32xf32, #tpu.memory_space<vmem>>, vector<8x32xf32>,
    return
  }
  func.func @transform_0(%arg0: i32, %arg1: i32) -> (i32, i32) {
    %c0_i32 = arith.constant 0 : i32
    %c0_i32_0 = arith.constant 0 : i32
    return %arg0, %c0_i32 : i32, i32
  }
  func.func @transform_1(%arg0: i32, %arg1: i32) -> (i32, i32) {
    %c0_i32 = arith.constant 0 : i32
    %c0_i32_0 = arith.constant 0 : i32
    return %arg1, %c0_i32 : i32, i32
  }
  func.func @transform_2(%arg0: i32, %arg1: i32) -> (i32, i32) {
    %c0_i32 = arith.constant 0 : i32
    %c0_i32_0 = arith.constant 0 : i32
    return %arg1, %c0_i32 : i32, i32
  }
  func.func @transform_3(%arg0: i32, %arg1: i32) -> (i32, i32) {
    %c0_i32 = arith.constant 0 : i32
    %c0_i32_0 = arith.constant 0 : i32
    return %arg1, %c0_i32 : i32, i32
  }
  func.func @transform_4(%arg0: i32, %arg1: i32) -> (i32, i32) {
    %c0_i32 = arith.constant 0 : i32
    return %arg0, %arg1 : i32, i32
  }
}

</mosaic_0001>

<llo_original>
// kernel: tpu_custom_call.1
$region0: #{tpu_custom_call.1}
  #allocation0 [shape = 'u32[]', space=smem, size = 0x4, offset = 0x4, fixed_abs, tag = 'smem constant byte address 0x4 - core index']
  #allocation1 [shape = 'u32[144,128]{1,0:T(1,128)}', space=vmem, size = 0x12000, scoped, tag = 'internal scratch']
  %s0 = inlined_call_operand.hbm [shape: f32[8,32], index: 0, kind: input, shape index: {}]
  %s1 = inlined_call_operand.hbm [shape: f32[32,32], index: 1, kind: input, shape index: {}]
  %s2 = inlined_call_operand.hbm [shape: f32[32,32], index: 2, kind: input, shape index: {}]
  %s3 = inlined_call_operand.hbm [shape: f32[32,32], index: 3, kind: input, shape index: {}]
  %s4 = inlined_call_operand.hbm [shape: f32[8,32], index: 4, kind: output, shape index: {}]
  %s5 = sld [smem:[#allocation0]]
  $region42: #{tpu_custom_call.1} parent=0
    _
  %s7 = ssub.s32 1, %s5
  %s8 = scalar_select 0, %s7, %s5
  $region1: #{tpu_custom_call.1} parent=0
    #allocation2 [shape = 'u8[4096]{0}', space=vmem, size = 0x1000, scoped, tag = 'input window, operand 0, single buffered']
    #allocation3 [shape = 's32[1]{0}', space=sflag, size = 0x4, scoped, tag = 'scoped memory for tpu_custom_call.1']
    #allocation4 [shape = 's32[1]{0}', space=sflag, size = 0x4, scoped, tag = 'scoped memory for tpu_custom_call.1']
    #allocation5 [shape = 'u8[16384]{0}', space=vmem, size = 0x4000, scoped, tag = 'input window, operand 1, single buffered']
    #allocation6 [shape = 's32[1]{0}', space=sflag, size = 0x4, scoped, tag = 'scoped memory for tpu_custom_call.1']
    #allocation7 [shape = 'u8[16384]{0}', space=vmem, size = 0x4000, scoped, tag = 'input window, operand 2, single buffered']
    #allocation8 [shape = 'u8[16384]{0}', space=vmem, size = 0x4000, scoped, tag = 'input window, operand 3, single buffered']
    #allocation9 [shape = 's32[1]{0}', space=sflag, size = 0x4, scoped, tag = 'scoped memory for tpu_custom_call.1']
    #allocation10 [shape = 'u8[4096]{0}', space=vmem, size = 0x1000, scoped, tag = 'output window, operand 0, single buffered']
    %9 = vsyncpa [#allocation3], 0
    %10 = vsyncpa [#allocation6], 0
    %11 = vsyncpa [#allocation9], 0
    %12 = vsyncpa [#allocation4], 0
    // Predicated region
    $region2: #{tpu_custom_call.1} parent=1 // pred_check
      _
    $region3: #{tpu_custom_call.1} parent=1 // pred_check_branch
      %14 = sbr.rel (0) target = $region5
    $region4: #{tpu_custom_call.1} parent=1 // pred_region
      %s16 = ssub.s32 128, 128
      %17 = vsyncadd [#allocation3], %s16
      %s19 = sshll.u32 [#allocation2], 4
      %s20 = int_to_ptr.vmem [resolvable:$true] %s19
      %22 = dma.hbm_to_vmem [thread:$0]  %s0, 128, %s20, [#allocation3]
    $region5: #{tpu_custom_call.1} parent=1 // pred_fallthru
      _
    // Predicated region
    $region6: #{tpu_custom_call.1} parent=1 // pred_check
      _
    $region7: #{tpu_custom_call.1} parent=1 // pred_check_branch
      %24 = sbr.rel (0) target = $region9
    $region8: #{tpu_custom_call.1} parent=1 // pred_region
      %s26 = ssub.s32 512, 512
      %27 = vsyncadd [#allocation6], %s26
      %s28 = sshll.u32 [#allocation5], 4
      %s29 = int_to_ptr.vmem [resolvable:$true] %s28
      %34 = dma.hbm_to_vmem [thread:$0]  %s1, 512, %s29, [#allocation6], 128, 128, 8
    $region9: #{tpu_custom_call.1} parent=1 // pred_fallthru
      _
    // Predicated region
    $region10: #{tpu_custom_call.1} parent=1 // pred_check
      _
    $region11: #{tpu_custom_call.1} parent=1 // pred_check_branch
      %36 = sbr.rel (0) target = $region13
    $region12: #{tpu_custom_call.1} parent=1 // pred_region
      %s38 = ssub.s32 512, 512
      %39 = vsyncadd [#allocation6], %s38
      %s40 = sshll.u32 [#allocation7], 4
      %s41 = int_to_ptr.vmem [resolvable:$true] %s40
      %46 = dma.hbm_to_vmem [thread:$0]  %s2, 512, %s41, [#allocation6], 128, 128, 8
    $region13: #{tpu_custom_call.1} parent=1 // pred_fallthru
      _
    // Predicated region
    $region14: #{tpu_custom_call.1} parent=1 // pred_check
      _
    $region15: #{tpu_custom_call.1} parent=1 // pred_check_branch
      %48 = sbr.rel (0) target = $region17
    $region16: #{tpu_custom_call.1} parent=1 // pred_region
      %s50 = ssub.s32 512, 512
      %51 = vsyncadd [#allocation9], %s50
      %s52 = sshll.u32 [#allocation8], 4
      %s53 = int_to_ptr.vmem [resolvable:$true] %s52
      %58 = dma.hbm_to_vmem [thread:$0]  %s3, 512, %s53, [#allocation9], 128, 128, 8
    $region17: #{tpu_custom_call.1} parent=1 // pred_fallthru
      _
    // Predicated region
    $region18: #{tpu_custom_call.1} parent=1 // pred_check
      _
    $region19: #{tpu_custom_call.1} parent=1 // pred_check_branch
      %60 = sbr.rel (0) target = $region21
    $region20: #{tpu_custom_call.1} parent=1 // pred_region
      %61 = dma.done [#allocation3], 128
    $region21: #{tpu_custom_call.1} parent=1 // pred_fallthru
      _
    // Predicated region
    $region22: #{tpu_custom_call.1} parent=1 // pred_check
      _
    $region23: #{tpu_custom_call.1} parent=1 // pred_check_branch
      %63 = sbr.rel (0) target = $region25
    $region24: #{tpu_custom_call.1} parent=1 // pred_region
      %64 = dma.done [#allocation6], 512
    $region25: #{tpu_custom_call.1} parent=1 // pred_fallthru
      _
    // Predicated region
    $region26: #{tpu_custom_call.1} parent=1 // pred_check
      _
    $region27: #{tpu_custom_call.1} parent=1 // pred_check_branch
      %66 = sbr.rel (0) target = $region29
    $region28: #{tpu_custom_call.1} parent=1 // pred_region
      %67 = dma.done [#allocation6], 512
    $region29: #{tpu_custom_call.1} parent=1 // pred_fallthru
      _
    // Predicated region
    $region30: #{tpu_custom_call.1} parent=1 // pred_check
      _
    $region31: #{tpu_custom_call.1} parent=1 // pred_check_branch
      %69 = sbr.rel (0) target = $region33
    $region32: #{tpu_custom_call.1} parent=1 // pred_region
      %70 = dma.done [#allocation9], 512
    $region33: #{tpu_custom_call.1} parent=1 // pred_fallthru
      _
    %v71 = vld [vmem:[#allocation2] sm:$0xff]
    %v72 = vld [vmem:[#allocation5] sm:$0xff]
    %v73 = vld [vmem:[#allocation5 + $0x8] sm:$0xff]
    %v74 = vld [vmem:[#allocation5 + $0x10] sm:$0xff]
    %v75 = vld [vmem:[#allocation5 + $0x18] sm:$0xff]
    %vm76 = vcmask 261120
    %v78 = vsel %vm76, %v71, 0
    %v81 = vsel %vm76, %v72, 0
    %v84 = vsel %vm76, %v73, 0
    %v87 = vsel %vm76, %v74, 0
    %v90 = vsel %vm76, %v75, 0
    %92 = vmatprep.subr.mxu0 0.0
    %93 = vmatpush1.xpose.msra.mxu0 0.0
    %94 = vmatprep.subr.mxu0 0.0
    %95 = vmatpush1.xpose.msra.mxu0 0.0
    %96 = vmatprep.subr.mxu0 0.0
    %97 = vmatpush1.xpose.msra.mxu0 0.0
    %98 = vmatprep.subr.mxu0 0.0
    %99 = vmatpush1.xpose.msra.mxu0 0.0
    %100 = vmatprep.subr.mxu0 0.0
    %101 = vmatpush1.xpose.msra.mxu0 0.0
    %102 = vmatprep.subr.mxu0 0.0
    %103 = vmatpush1.xpose.msra.mxu0 0.0
    %104 = vmatprep.subr.mxu0 0.0
    %105 = vmatpush1.xpose.msra.mxu0 0.0
    %106 = vmatprep.subr.mxu0 0.0
    %107 = vmatpush1.xpose.msra.mxu0 0.0
    %108 = vmatprep.subr.mxu0 0.0
    %109 = vmatpush1.xpose.msra.mxu0 0.0
    %110 = vmatprep.subr.mxu0 0.0
    %111 = vmatpush1.xpose.msra.mxu0 0.0
    %112 = vmatprep.subr.mxu0 0.0
    %113 = vmatpush1.xpose.msra.mxu0 0.0
    %114 = vmatprep.subr.mxu0 0.0
    %115 = vmatpush1.xpose.msra.mxu0 0.0
    %116 = vmatprep.subr.mxu0 0.0
    %117 = vmatpush1.xpose.msra.mxu0 %v90
    %118 = vmatprep.subr.mxu0 0.0
    %119 = vmatpush1.xpose.msra.mxu0 %v87
    %120 = vmatprep.subr.mxu0 0.0
    %121 = vmatpush1.xpose.msra.mxu0 %v84
    %122 = vmatprep.subr.mxu0 0.0
    %123 = vmatpush1.xpose.msra.mxu0 %v81
    %124 = vmatprep.subr.mxu0 0.0
    %125 = vmatpush2.xpose.msra.mxu0 0.0
    %126 = vmatprep.subr.mxu0 0.0
    %127 = vmatpush2.xpose.msra.mxu0 0.0
    %128 = vmatprep.subr.mxu0 0.0
    %129 = vmatpush2.xpose.msra.mxu0 0.0
    %130 = vmatprep.subr.mxu0 0.0
    %131 = vmatpush2.xpose.msra.mxu0 0.0
    %132 = vmatprep.subr.mxu0 0.0
    %133 = vmatpush2.xpose.msra.mxu0 0.0
    %134 = vmatprep.subr.mxu0 0.0
    %135 = vmatpush2.xpose.msra.mxu0 0.0
    %136 = vmatprep.subr.mxu0 0.0
    %137 = vmatpush2.xpose.msra.mxu0 0.0
    %138 = vmatprep.subr.mxu0 0.0
    %139 = vmatpush2.xpose.msra.mxu0 0.0
    %140 = vmatprep.subr.mxu0 0.0
    %141 = vmatpush2.xpose.msra.mxu0 0.0
    %142 = vmatprep.subr.mxu0 0.0
    %143 = vmatpush2.xpose.msra.mxu0 0.0
    %144 = vmatprep.subr.mxu0 0.0
    %145 = vmatpush2.xpose.msra.mxu0 0.0
    %146 = vmatprep.subr.mxu0 0.0
    %147 = vmatpush2.xpose.msra.mxu0 0.0
    %148 = vmatprep.subr.mxu0 0.0
    %149 = vmatpush2.xpose.msra.mxu0 0.0
    %150 = vmatprep.subr.mxu0 0.0
    %151 = vmatpush2.xpose.msra.mxu0 0.0
    %152 = vmatprep.subr.mxu0 0.0
    %153 = vmatpush2.xpose.msra.mxu0 0.0
    %154 = vmatprep.subr.mxu0 0.0
    %155 = vmatpush2.xpose.msra.mxu0 0.0
    %156 = vmatprep.mubr.f32.mxu0 0.0
    %157 = vmatmul.mubr.f32.gmra.mxu0 %v78
    %v158 = vpop.f32.mrf.mxu0
    %v159 = vadd.f32 0.0, %v158
    %v160 = vpop.f32.mrf.mxu0
    %161 = vdwg.mxu0
    %v162 = vld [vmem:[#allocation7] sm:$0xff]
    %v163 = vld [vmem:[#allocation7 + $0x8] sm:$0xff]
    %v164 = vld [vmem:[#allocation7 + $0x10] sm:$0xff]
    %v165 = vld [vmem:[#allocation7 + $0x18] sm:$0xff]
    %v167 = vsel %vm76, %v162, 0
    %v170 = vsel %vm76, %v163, 0
    %v173 = vsel %vm76, %v164, 0
    %v176 = vsel %vm76, %v165, 0
    %178 = vmatprep.subr.mxu0 0.0
    %179 = vmatpush1.xpose.msra.mxu0 0.0
    %180 = vmatprep.subr.mxu0 0.0
    %181 = vmatpush1.xpose.msra.mxu0 0.0
    %182 = vmatprep.subr.mxu0 0.0
    %183 = vmatpush1.xpose.msra.mxu0 0.0
    %184 = vmatprep.subr.mxu0 0.0
    %185 = vmatpush1.xpose.msra.mxu0 0.0
    %186 = vmatprep.subr.mxu0 0.0
    %187 = vmatpush1.xpose.msra.mxu0 0.0
    %188 = vmatprep.subr.mxu0 0.0
    %189 = vmatpush1.xpose.msra.mxu0 0.0
    %190 = vmatprep.subr.mxu0 0.0
    %191 = vmatpush1.xpose.msra.mxu0 0.0
    %192 = vmatprep.subr.mxu0 0.0
    %193 = vmatpush1.xpose.msra.mxu0 0.0
    %194 = vmatprep.subr.mxu0 0.0
    %195 = vmatpush1.xpose.msra.mxu0 0.0
    %196 = vmatprep.subr.mxu0 0.0
    %197 = vmatpush1.xpose.msra.mxu0 0.0
    %198 = vmatprep.subr.mxu0 0.0
    %199 = vmatpush1.xpose.msra.mxu0 0.0
    %200 = vmatprep.subr.mxu0 0.0
    %201 = vmatpush1.xpose.msra.mxu0 0.0
    %202 = vmatprep.subr.mxu0 0.0
    %203 = vmatpush1.xpose.msra.mxu0 %v176
    %204 = vmatprep.subr.mxu0 0.0
    %205 = vmatpush1.xpose.msra.mxu0 %v173
    %206 = vmatprep.subr.mxu0 0.0
    %207 = vmatpush1.xpose.msra.mxu0 %v170
    %208 = vmatprep.subr.mxu0 0.0
    %209 = vmatpush1.xpose.msra.mxu0 %v167
    %210 = vmatprep.subr.mxu0 0.0
    %211 = vmatpush2.xpose.msra.mxu0 0.0
    %212 = vmatprep.subr.mxu0 0.0
    %213 = vmatpush2.xpose.msra.mxu0 0.0
    %214 = vmatprep.subr.mxu0 0.0
    %215 = vmatpush2.xpose.msra.mxu0 0.0
    %216 = vmatprep.subr.mxu0 0.0
    %217 = vmatpush2.xpose.msra.mxu0 0.0
    %218 = vmatprep.subr.mxu0 0.0
    %219 = vmatpush2.xpose.msra.mxu0 0.0
    %220 = vmatprep.subr.mxu0 0.0
    %221 = vmatpush2.xpose.msra.mxu0 0.0
    %222 = vmatprep.subr.mxu0 0.0
    %223 = vmatpush2.xpose.msra.mxu0 0.0
    %224 = vmatprep.subr.mxu0 0.0
    %225 = vmatpush2.xpose.msra.mxu0 0.0
    %226 = vmatprep.subr.mxu0 0.0
    %227 = vmatpush2.xpose.msra.mxu0 0.0
    %228 = vmatprep.subr.mxu0 0.0
    %229 = vmatpush2.xpose.msra.mxu0 0.0
    %230 = vmatprep.subr.mxu0 0.0
    %231 = vmatpush2.xpose.msra.mxu0 0.0
    %232 = vmatprep.subr.mxu0 0.0
    %233 = vmatpush2.xpose.msra.mxu0 0.0
    %234 = vmatprep.subr.mxu0 0.0
    %235 = vmatpush2.xpose.msra.mxu0 0.0
    %236 = vmatprep.subr.mxu0 0.0
    %237 = vmatpush2.xpose.msra.mxu0 0.0
    %238 = vmatprep.subr.mxu0 0.0
    %239 = vmatpush2.xpose.msra.mxu0 0.0
    %240 = vmatprep.subr.mxu0 0.0
    %241 = vmatpush2.xpose.msra.mxu0 0.0
    %242 = vmatprep.mubr.f32.mxu0 0.0
    %243 = vmatmul.mubr.f32.gmra.mxu0 %v78
    %v244 = vpop.f32.mrf.mxu0
    %v245 = vadd.f32 0.0, %v244
    %v246 = vpop.f32.mrf.mxu0
    %247 = vdwg.mxu0
    %v248 = vxor.u32 %v245, 2147483648
    %v249 = vmul.f32 %v248, 1.442695
    %v250 = vpow.pop %v249
    %v251 = vadd.f32 %v250, 1.0
    %v252 = vrcp.pop %v251
    %v253 = vmul.f32 1.0, %v252
    %v254 = vand.u32 2147483647, %v71
    %v255 = vmax.f32 %v254, 1e-12
    %v256 = vlog2.pop %v255
    %v257 = vmul.f32 %v256, 0.6931472
    %v258 = vld [vmem:[#allocation8] sm:$0xff]
    %v259 = vld [vmem:[#allocation8 + $0x8] sm:$0xff]
    %v260 = vld [vmem:[#allocation8 + $0x10] sm:$0xff]
    %v261 = vld [vmem:[#allocation8 + $0x18] sm:$0xff]
    %v263 = vsel %vm76, %v257, 0
    %v266 = vsel %vm76, %v258, 0
    %v269 = vsel %vm76, %v259, 0
    %v272 = vsel %vm76, %v260, 0
    %v275 = vsel %vm76, %v261, 0
    %277 = vmatprep.subr.mxu0 0.0
    %278 = vmatpush1.xpose.msra.mxu0 0.0
    %279 = vmatprep.subr.mxu0 0.0
    %280 = vmatpush1.xpose.msra.mxu0 0.0
    %281 = vmatprep.subr.mxu0 0.0
    %282 = vmatpush1.xpose.msra.mxu0 0.0
    %283 = vmatprep.subr.mxu0 0.0
    %284 = vmatpush1.xpose.msra.mxu0 0.0
    %285 = vmatprep.subr.mxu0 0.0
    %286 = vmatpush1.xpose.msra.mxu0 0.0
    %287 = vmatprep.subr.mxu0 0.0
    %288 = vmatpush1.xpose.msra.mxu0 0.0
    %289 = vmatprep.subr.mxu0 0.0
    %290 = vmatpush1.xpose.msra.mxu0 0.0
    %291 = vmatprep.subr.mxu0 0.0
    %292 = vmatpush1.xpose.msra.mxu0 0.0
    %293 = vmatprep.subr.mxu0 0.0
    %294 = vmatpush1.xpose.msra.mxu0 0.0
    %295 = vmatprep.subr.mxu0 0.0
    %296 = vmatpush1.xpose.msra.mxu0 0.0
    %297 = vmatprep.subr.mxu0 0.0
    %298 = vmatpush1.xpose.msra.mxu0 0.0
    %299 = vmatprep.subr.mxu0 0.0
    %300 = vmatpush1.xpose.msra.mxu0 0.0
    %301 = vmatprep.subr.mxu0 0.0
    %302 = vmatpush1.xpose.msra.mxu0 %v275
    %303 = vmatprep.subr.mxu0 0.0
    %304 = vmatpush1.xpose.msra.mxu0 %v272
    %305 = vmatprep.subr.mxu0 0.0
    %306 = vmatpush1.xpose.msra.mxu0 %v269
    %307 = vmatprep.subr.mxu0 0.0
    %308 = vmatpush1.xpose.msra.mxu0 %v266
    %309 = vmatprep.subr.mxu0 0.0
    %310 = vmatpush2.xpose.msra.mxu0 0.0
    %311 = vmatprep.subr.mxu0 0.0
    %312 = vmatpush2.xpose.msra.mxu0 0.0
    %313 = vmatprep.subr.mxu0 0.0
    %314 = vmatpush2.xpose.msra.mxu0 0.0
    %315 = vmatprep.subr.mxu0 0.0
    %316 = vmatpush2.xpose.msra.mxu0 0.0
    %317 = vmatprep.subr.mxu0 0.0
    %318 = vmatpush2.xpose.msra.mxu0 0.0
    %319 = vmatprep.subr.mxu0 0.0
    %320 = vmatpush2.xpose.msra.mxu0 0.0
    %321 = vmatprep.subr.mxu0 0.0
    %322 = vmatpush2.xpose.msra.mxu0 0.0
    %323 = vmatprep.subr.mxu0 0.0
    %324 = vmatpush2.xpose.msra.mxu0 0.0
    %325 = vmatprep.subr.mxu0 0.0
    %326 = vmatpush2.xpose.msra.mxu0 0.0
    %327 = vmatprep.subr.mxu0 0.0
    %328 = vmatpush2.xpose.msra.mxu0 0.0
    %329 = vmatprep.subr.mxu0 0.0
    %330 = vmatpush2.xpose.msra.mxu0 0.0
    %331 = vmatprep.subr.mxu0 0.0
    %332 = vmatpush2.xpose.msra.mxu0 0.0
    %333 = vmatprep.subr.mxu0 0.0
    %334 = vmatpush2.xpose.msra.mxu0 0.0
    %335 = vmatprep.subr.mxu0 0.0
    %336 = vmatpush2.xpose.msra.mxu0 0.0
    %337 = vmatprep.subr.mxu0 0.0
    %338 = vmatpush2.xpose.msra.mxu0 0.0
    %339 = vmatprep.subr.mxu0 0.0
    %340 = vmatpush2.xpose.msra.mxu0 0.0
    %341 = vmatprep.mubr.f32.mxu0 0.0
    %342 = vmatmul.mubr.f32.gmra.mxu0 %v263
    %v343 = vpop.f32.mrf.mxu0
    %v344 = vadd.f32 0.0, %v343
    %v345 = vpop.f32.mrf.mxu0
    %346 = vdwg.mxu0
    %v347 = vmin.f32 %v344, 1e-12
    %v348 = vmul.f32 %v347, 1.442695
    %v349 = vpow.pop %v348
    %v350 = vsub.f32 %v159, %v349
    %v351 = vmul.f32 %v253, %v350
    %v352 = vadd.f32 %v349, %v351
    %353 = vst.msk [vmem:[#allocation10] sm:$0xff] %vm76, %v352
    // Predicated region
    $region34: #{tpu_custom_call.1} parent=1 // pred_check
      _
    $region35: #{tpu_custom_call.1} parent=1 // pred_check_branch
      %355 = sbr.rel (0) target = $region37
    $region36: #{tpu_custom_call.1} parent=1 // pred_region
      %s357 = ssub.s32 128, 128
      %358 = vsyncadd [#allocation4], %s357
      %s360 = sshll.u32 [#allocation10], 4
      %s361 = int_to_ptr.vmem [resolvable:$true] %s360
      %363 = dma.vmem_to_hbm [thread:$0]  %s361, 128, %s4, [#allocation4]
    $region37: #{tpu_custom_call.1} parent=1 // pred_fallthru
      _
    // Predicated region
    $region38: #{tpu_custom_call.1} parent=1 // pred_check
      _
    $region39: #{tpu_custom_call.1} parent=1 // pred_check_branch
      %365 = sbr.rel (0) target = $region41
    $region40: #{tpu_custom_call.1} parent=1 // pred_region
      %366 = dma.done [#allocation4], 128
    $region41: #{tpu_custom_call.1} parent=1 // pred_fallthru
      _
    %367 = vsyncpa [#allocation3], 1
    %368 = vsyncpa [#allocation6], 1
    %369 = vsyncpa [#allocation9], 1
    %370 = vsyncpa [#allocation4], 1

</llo_original>
